<compile_context>
chip_gen: v7x
topology: tpu7x:2x2x1
jax: 0.10.0
libtpu: 0.0.40
codegen_flags: <defaults>
</compile_context>

<pallas_src>
import functools
import math

import jax
import jax.numpy as jnp
from jax import lax
from jax.experimental import pallas as pl
from jax.experimental.pallas import tpu as pltpu

_LANE_CANDIDATES = (2048, 1024, 512, 256, 128)
# ~2 MiB per block buffer => (in + out) x double-buffer ~= 8 MiB of VMEM.
_TARGET_BLOCK_BYTES = 2 * 1024 * 1024


def _hash_u32(x):
    """splitmix32-style finalizer; pure 32-bit VPU ops (mul wraps mod 2**32)."""
    x = x ^ (x >> 16)
    x = x * jnp.uint32(0x7FEB352D)
    x = x ^ (x >> 15)
    x = x * jnp.uint32(0x846CA68B)
    x = x ^ (x >> 16)
    return x


def _add_gaussian_noise_kernel(seed_ref, x_ref, o_ref, *, std, mean,
                               block_elems, approx_normal):
    shape = x_ref.shape  # (block_rows, lanes), static
    blk = pl.program_id(0).astype(jnp.uint32)
    seed = seed_ref[0].astype(jnp.uint32)
    s = _hash_u32(seed ^ jnp.uint32(0x9E3779B9))

    # Global element counter (unique across the whole grid) -> per-tile
    # decorrelated noise even though each grid step re-derives its stream.
    row = lax.broadcasted_iota(jnp.int32, shape, 0)
    col = lax.broadcasted_iota(jnp.int32, shape, 1)
    local = (row * shape[1] + col).astype(jnp.uint32)
    c = blk * jnp.uint32(block_elems) + local

    if not approx_normal:
        # Exact standard normal via Box-Muller (EUP: log, sqrt, cos).
        s2 = _hash_u32(s + jnp.uint32(0x68BC21EB))
        b1 = _hash_u32(c ^ s)
        b2 = _hash_u32(c ^ s2)
        u1 = ((b1 >> 8).astype(jnp.int32).astype(jnp.float32) + 1.0) * \
            jnp.float32(1.0 / (1 << 24))          # (0, 1]
        u2 = (b2 >> 8).astype(jnp.int32).astype(jnp.float32) * \
            jnp.float32(1.0 / (1 << 24))          # [0, 1)
        r = jnp.sqrt(-2.0 * jnp.log(u1))
        z = r * jnp.cos(jnp.float32(2.0 * math.pi) * u2)
    else:
        # VPU-only approximate normal: Irwin-Hall, sum of 12 16-bit uniforms
        # minus 6 (mean 0, variance 1).  Avoids the single EUP entirely.
        z = jnp.zeros(shape, jnp.float32)
        for k in range(6):
            offset = jnp.uint32((k * 0x9E3779B9) % (1 << 32))
            h = _hash_u32((c + offset) ^ s)
            lo = (h & jnp.uint32(0xFFFF)).astype(jnp.int32).astype(jnp.float32)
            hi = (h >> 16).astype(jnp.int32).astype(jnp.float32)
            z = z + (lo + hi) * jnp.float32(1.0 / (1 << 16))
        z = z - jnp.float32(6.0)

    # Keep the add in the input dtype (bf16 stays bf16 on v6e/v7x VPUs).
    noise = z * jnp.float32(std) + jnp.float32(mean)
    o_ref[...] = x_ref[...] + noise.astype(o_ref.dtype)


def _choose_slab(total):
    """Pick the widest lane-dense (rows, lanes) slab; prefer rows % 8 == 0."""
    for lanes in _LANE_CANDIDATES:
        if total % lanes == 0 and (total // lanes) % 8 == 0:
            return total // lanes, lanes
    for lanes in _LANE_CANDIDATES:
        if total % lanes == 0:
            return total // lanes, lanes
    return None


def _choose_block_rows(rows, lanes, itemsize):
    if rows % 8 != 0:
        return rows  # rows is the full dim -> single block along rows
    target = max(8, (_TARGET_BLOCK_BYTES // (itemsize * lanes)) // 8 * 8)
    block_rows = min(target, rows)
    block_rows -= block_rows % 8
    while block_rows > 8 and rows % block_rows != 0:
        block_rows -= 8
    return max(block_rows, 8)


def add_gaussian_noise(x, seed, *, mean: float = 0.0, std: float = 1.0 / 255,
                       training: bool = True, approx_normal: bool = False):
    """Pallas implementation of AddGaussianNoise.forward.

    x:    any-shape float array (NCHW expected, but shape-agnostic).
    seed: python int or int32 scalar seeding the noise stream (vary per step).
    """
    if not training:
        return x

    orig_shape, orig_dtype = x.shape, x.dtype
    total = x.size

    slab = _choose_slab(total)
    if slab is None:
        # TODO(synk): handle the ragged tail in-kernel (masked store) to avoid
        # this extra HBM copy; only hit when total is not a multiple of 128.
        pad_to = 8 * 128
        padded_total = ((total + pad_to - 1) // pad_to) * pad_to
        x_flat = jnp.pad(jnp.reshape(x, (total,)), (0, padded_total - total))
        rows, lanes = padded_total // 128, 128
        x2d = jnp.reshape(x_flat, (rows, lanes))
    else:
        rows, lanes = slab
        x2d = jnp.reshape(x, (rows, lanes))  # pure reshape, no data copy
        padded_total = total

    block_rows = _choose_block_rows(rows, lanes, jnp.dtype(orig_dtype).itemsize)
    grid = (rows // block_rows,)

    seed_arr = jnp.asarray(seed, dtype=jnp.int32).reshape((1,))
    kernel = functools.partial(
        _add_gaussian_noise_kernel,
        std=float(std), mean=float(mean),
        block_elems=block_rows * lanes,
        approx_normal=approx_normal)

    # Note: input_output_aliases could donate x2d's buffer to the output to cut
    # HBM footprint; omitted here to keep the call maximally portable.
    out2d = pl.pallas_call(
        kernel,
        out_shape=jax.ShapeDtypeStruct((rows, lanes), orig_dtype),
        grid_spec=pltpu.PrefetchScalarGridSpec(
            num_scalar_prefetch=1,
            grid=grid,
            in_specs=[pl.BlockSpec((block_rows, lanes), lambda i, seed: (i, 0))],
            out_specs=pl.BlockSpec((block_rows, lanes), lambda i, seed: (i, 0)),
        ),
        compiler_params=pltpu.CompilerParams(
            dimension_semantics=("parallel",)),
    )(seed_arr, x2d)

    if padded_total != total:
        out = jnp.reshape(out2d, (padded_total,))[:total]
        return jnp.reshape(out, orig_shape)
    return jnp.reshape(out2d, orig_shape)


if __name__ == "__main__":
    key = jax.random.PRNGKey(0)
    # Small NCHW input, consistent with an image-augmentation module.
    x = jax.random.normal(key, (2, 4, 16, 16), dtype=jnp.float32)

    # Default (exact Box-Muller) path.
    out = add_gaussian_noise(x, seed=0, mean=0.0, std=1.0 / 255, training=True)
    out = jax.block_until_ready(out)
    assert out.shape == x.shape and out.dtype == x.dtype
    max_dev = float(jnp.max(jnp.abs(out - x)))
    assert 0.0 < max_dev < 0.1, f"unexpected noise magnitude: {max_dev}"

    # VPU-only approximate-normal path (for EUP-bound chips).
    out_approx = jax.block_until_ready(
        add_gaussian_noise(x, seed=1, training=True, approx_normal=True))
    max_dev_a = float(jnp.max(jnp.abs(out_approx - x)))
    assert 0.0 < max_dev_a < 0.1, f"unexpected approx-noise magnitude: {max_dev_a}"

    # Eval mode is identity.
    out_eval = jax.block_until_ready(
        add_gaussian_noise(x, seed=0, training=False))
    assert bool(jnp.all(out_eval == x))

    print("KERNEL_OK")
</pallas_src>

<mosaic_0001>
module attributes {stable_mosaic.version = 11 : i64} {
  func.func @_add_gaussian_noise_kernel(%arg0: i32, %arg1: memref<1xi32, #tpu.memory_space<smem>>, %arg2: memref<8x256xf32, #tpu.memory_space<vmem>>, %arg3: memref<8x256xf32, #tpu.memory_space<vmem>>) attributes {dimension_semantics = [#tpu.dimension_semantics<parallel>], iteration_bounds = array<i64: 1>, scalar_prefetch = 1 : i64, scratch_operands = 0 : i64, tpu.core_type = #tpu.core_type<tc>, window_params = [{transform_indices = @transform_0, window_bounds = array<i64: 8, 256>}, {transform_indices = @transform_1, window_bounds = array<i64: 8, 256>}]} {
    %c0 = arith.constant 0 : index
    %0 = memref.load %arg1[%c0] : memref<1xi32, #tpu.memory_space<smem>>
    %c-1640531527_i32 = arith.constant -1640531527 : i32
    %1 = arith.xori %0, %c-1640531527_i32 : i32
    %c16_i32 = arith.constant 16 : i32
    %2 = arith.shrui %1, %c16_i32 : i32
    %3 = arith.xori %1, %2 : i32
    %c2146121005_i32 = arith.constant 2146121005 : i32
    %4 = arith.muli %3, %c2146121005_i32 : i32
    %c15_i32 = arith.constant 15 : i32
    %5 = arith.shrui %4, %c15_i32 : i32
    %6 = arith.xori %4, %5 : i32
    %c-2073254261_i32 = arith.constant -2073254261 : i32
    %7 = arith.muli %6, %c-2073254261_i32 : i32
    %c16_i32_0 = arith.constant 16 : i32
    %8 = arith.shrui %7, %c16_i32_0 : i32
    %9 = arith.xori %7, %8 : i32
    %10 = tpu.iota {dimensions = array<i32: 0>} : vector<8x256xi32>
    %11 = tpu.iota {dimensions = array<i32: 1>} : vector<8x256xi32>
    %c256_i32 = arith.constant 256 : i32
    %12 = vector.broadcast %c256_i32 : i32 to vector<8x256xi32>
    %13 = arith.muli %10, %12 : vector<8x256xi32>
    %14 = arith.addi %13, %11 : vector<8x256xi32>
    %c2048_i32 = arith.constant 2048 : i32
    %15 = arith.muli %arg0, %c2048_i32 : i32
    %16 = vector.broadcast %15 : i32 to vector<8x256xi32>
    %17 = arith.addi %16, %14 : vector<8x256xi32>
    %c1757159915_i32 = arith.constant 1757159915 : i32
    %18 = arith.addi %9, %c1757159915_i32 : i32
    %c16_i32_1 = arith.constant 16 : i32
    %19 = arith.shrui %18, %c16_i32_1 : i32
    %20 = arith.xori %18, %19 : i32
    %c2146121005_i32_2 = arith.constant 2146121005 : i32
    %21 = arith.muli %20, %c2146121005_i32_2 : i32
    %c15_i32_3 = arith.constant 15 : i32
    %22 = arith.shrui %21, %c15_i32_3 : i32
    %23 = arith.xori %21, %22 : i32
    %c-2073254261_i32_4 = arith.constant -2073254261 : i32
    %24 = arith.muli %23, %c-2073254261_i32_4 : i32
    %c16_i32_5 = arith.constant 16 : i32
    %25 = arith.shrui %24, %c16_i32_5 : i32
    %26 = arith.xori %24, %25 : i32
    %27 = vector.broadcast %9 : i32 to vector<8x256xi32>
    %28 = arith.xori %17, %27 : vector<8x256xi32>
    %c16_i32_6 = arith.constant 16 : i32
    %29 = vector.broadcast %c16_i32_6 : i32 to vector<8x256xi32>
    %30 = arith.shrui %28, %29 : vector<8x256xi32>
    %31 = arith.xori %28, %30 : vector<8x256xi32>
    %c2146121005_i32_7 = arith.constant 2146121005 : i32
    %32 = vector.broadcast %c2146121005_i32_7 : i32 to vector<8x256xi32>
    %33 = arith.muli %31, %32 : vector<8x256xi32>
    %c15_i32_8 = arith.constant 15 : i32
    %34 = vector.broadcast %c15_i32_8 : i32 to vector<8x256xi32>
    %35 = arith.shrui %33, %34 : vector<8x256xi32>
    %36 = arith.xori %33, %35 : vector<8x256xi32>
    %c-2073254261_i32_9 = arith.constant -2073254261 : i32
    %37 = vector.broadcast %c-2073254261_i32_9 : i32 to vector<8x256xi32>
    %38 = arith.muli %36, %37 : vector<8x256xi32>
    %c16_i32_10 = arith.constant 16 : i32
    %39 = vector.broadcast %c16_i32_10 : i32 to vector<8x256xi32>
    %40 = arith.shrui %38, %39 : vector<8x256xi32>
    %41 = arith.xori %38, %40 : vector<8x256xi32>
    %42 = vector.broadcast %26 : i32 to vector<8x256xi32>
    %43 = arith.xori %17, %42 : vector<8x256xi32>
    %c16_i32_11 = arith.constant 16 : i32
    %44 = vector.broadcast %c16_i32_11 : i32 to vector<8x256xi32>
    %45 = arith.shrui %43, %44 : vector<8x256xi32>
    %46 = arith.xori %43, %45 : vector<8x256xi32>
    %c2146121005_i32_12 = arith.constant 2146121005 : i32
    %47 = vector.broadcast %c2146121005_i32_12 : i32 to vector<8x256xi32>
    %48 = arith.muli %46, %47 : vector<8x256xi32>
    %c15_i32_13 = arith.constant 15 : i32
    %49 = vector.broadcast %c15_i32_13 : i32 to vector<8x256xi32>
    %50 = arith.shrui %48, %49 : vector<8x256xi32>
    %51 = arith.xori %48, %50 : vector<8x256xi32>
    %c-2073254261_i32_14 = arith.constant -2073254261 : i32
    %52 = vector.broadcast %c-2073254261_i32_14 : i32 to vector<8x256xi32>
    %53 = arith.muli %51, %52 : vector<8x256xi32>
    %c16_i32_15 = arith.constant 16 : i32
    %54 = vector.broadcast %c16_i32_15 : i32 to vector<8x256xi32>
    %55 = arith.shrui %53, %54 : vector<8x256xi32>
    %56 = arith.xori %53, %55 : vector<8x256xi32>
    %c8_i32 = arith.constant 8 : i32
    %57 = vector.broadcast %c8_i32 : i32 to vector<8x256xi32>
    %58 = arith.shrui %41, %57 : vector<8x256xi32>
    %59 = arith.sitofp %58 : vector<8x256xi32> to vector<8x256xf32>
    %cst = arith.constant 1.000000e+00 : f32
    %60 = vector.broadcast %cst : f32 to vector<8x256xf32>
    %61 = arith.addf %59, %60 : vector<8x256xf32>
    %cst_16 = arith.constant 5.96046448E-8 : f32
    %62 = vector.broadcast %cst_16 : f32 to vector<8x256xf32>
    %63 = arith.mulf %61, %62 : vector<8x256xf32>
    %c8_i32_17 = arith.constant 8 : i32
    %64 = vector.broadcast %c8_i32_17 : i32 to vector<8x256xi32>
    %65 = arith.shrui %56, %64 : vector<8x256xi32>
    %66 = arith.sitofp %65 : vector<8x256xi32> to vector<8x256xf32>
    %cst_18 = arith.constant 5.96046448E-8 : f32
    %67 = vector.broadcast %cst_18 : f32 to vector<8x256xf32>
    %68 = arith.mulf %66, %67 : vector<8x256xf32>
    %69 = math.log %63 : vector<8x256xf32>
    %cst_19 = arith.constant -2.000000e+00 : f32
    %70 = vector.broadcast %cst_19 : f32 to vector<8x256xf32>
    %71 = arith.mulf %70, %69 : vector<8x256xf32>
    %72 = math.sqrt %71 : vector<8x256xf32>
    %cst_20 = arith.constant 6.28318548 : f32
    %73 = vector.broadcast %cst_20 : f32 to vector<8x256xf32>
    %74 = arith.mulf %73, %68 : vector<8x256xf32>
    %75 = math.cos %74 : vector<8x256xf32>
    %76 = arith.mulf %72, %75 : vector<8x256xf32>
    %cst_21 = arith.constant 0.00392156886 : f32
    %77 = vector.broadcast %cst_21 : f32 to vector<8x256xf32>
    %78 = arith.mulf %76, %77 : vector<8x256xf32>
    %cst_22 = arith.constant 0.000000e+00 : f32
    %79 = vector.broadcast %cst_22 : f32 to vector<8x256xf32>
    %80 = arith.addf %78, %79 : vector<8x256xf32>
    %c0_23 = arith.constant 0 : index
    %c0_24 = arith.constant 0 : index
    %81 = vector.load %arg2[%c0_23, %c0_24] : memref<8x256xf32, #tpu.memory_space<vmem>>, vector<8x256xf32>
    %82 = arith.addf %81, %80 : vector<8x256xf32>
    %c0_25 = arith.constant 0 : index
    %c0_26 = arith.constant 0 : index
    %83 = vector.load %arg3[%c0_25, %c0_26] : memref<8x256xf32, #tpu.memory_space<vmem>>, vector<8x256xf32>
    tpu.vector_store %arg3[%c0_25, %c0_26], %82 {strides = array<i32>} : memref<8x256xf32, #tpu.memory_space<vmem>>, vector<8x256xf32>,
    return
  }
  func.func @transform_0(%arg0: i32, %arg1: memref<1xi32, #tpu.memory_space<smem>>) -> (i32, i32) {
    %c0_i32 = arith.constant 0 : i32
    %c0_i32_0 = arith.constant 0 : i32
    return %arg0, %c0_i32 : i32, i32
  }
  func.func @transform_1(%arg0: i32, %arg1: memref<1xi32, #tpu.memory_space<smem>>) -> (i32, i32) {
    %c0_i32 = arith.constant 0 : i32
    %c0_i32_0 = arith.constant 0 : i32
    return %arg0, %c0_i32 : i32, i32
  }
}

</mosaic_0001>

<llo_original>
// kernel: tpu_custom_call.1
$region0: #{tpu_custom_call.1}
  #allocation0 [shape = 'u32[]', space=smem, size = 0x4, offset = 0x4, fixed_abs, tag = 'smem constant byte address 0x4 - core index']
  #allocation1 [shape = 'u32[144,128]{1,0:T(1,128)}', space=vmem, size = 0x12000, scoped, tag = 'internal scratch']
  #allocation2 [shape = 's32[1]{0}', space=sflag, size = 0x4, scoped, tag = 'scoped memory for tpu_custom_call.1']
  #allocation3 [shape = 's32[1]{0:T(128)S(6)}', space=smem, size = 0x200, scoped, tag = 'prefetched SMEM operand 0']
  %s0 = inlined_call_operand.<no memory space> [shape: s32[1], index: 0, kind: input, shape index: {}]
  %s1 = inlined_call_operand.hbm [shape: f32[8,256], index: 1, kind: input, shape index: {}]
  %s2 = inlined_call_operand.hbm [shape: f32[8,256], index: 2, kind: output, shape index: {}]
  %s3 = sld [smem:[#allocation0]]
  $region18: #{tpu_custom_call.1} parent=0
    _
  %s5 = ssub.s32 1, %s3
  %s6 = scalar_select 0, %s5, %s3
  %7 = sst [smem:[#allocation3]] %s0
  $region1: #{tpu_custom_call.1} parent=0
    #allocation4 [shape = 'u8[8192]{0}', space=vmem, size = 0x2000, scoped, tag = 'input window, operand 1, single buffered']
    #allocation5 [shape = 's32[1]{0}', space=sflag, size = 0x4, scoped, tag = 'scoped memory for tpu_custom_call.1']
    #allocation6 [shape = 's32[1]{0}', space=sflag, size = 0x4, scoped, tag = 'scoped memory for tpu_custom_call.1']
    #allocation7 [shape = 'u8[8192]{0}', space=vmem, size = 0x2000, scoped, tag = 'output window, operand 0, single buffered']
    %8 = vsyncpa [#allocation5], 0
    %9 = vsyncpa [#allocation6], 0
    // Predicated region
    $region2: #{tpu_custom_call.1} parent=1 // pred_check
      _
    $region3: #{tpu_custom_call.1} parent=1 // pred_check_branch
      %11 = sbr.rel (0) target = $region5
    $region4: #{tpu_custom_call.1} parent=1 // pred_region
      %s13 = ssub.s32 256, 256
      %14 = vsyncadd [#allocation5], %s13
      %s16 = sshll.u32 [#allocation4], 4
      %s17 = int_to_ptr.vmem [resolvable:$true] %s16
      %19 = dma.hbm_to_vmem [thread:$0]  %s1, 256, %s17, [#allocation5]
    $region5: #{tpu_custom_call.1} parent=1 // pred_fallthru
      _
    // Predicated region
    $region6: #{tpu_custom_call.1} parent=1 // pred_check
      _
    $region7: #{tpu_custom_call.1} parent=1 // pred_check_branch
      %21 = sbr.rel (0) target = $region9
    $region8: #{tpu_custom_call.1} parent=1 // pred_region
      %22 = dma.done [#allocation5], 256
    $region9: #{tpu_custom_call.1} parent=1 // pred_fallthru
      _
    %s23 = sld [smem:[#allocation3]]
    %s24 = sxor.u32 %s23, 2654435769
    %s25 = sshrl.u32 %s24, 16
    %s26 = sxor.u32 %s24, %s25
    %s27 = smul.u32 %s26, 2146121005
    %s28 = sshrl.u32 %s27, 15
    %s29 = sxor.u32 %s27, %s28
    %s30 = smul.u32 %s29, 2221713035
    %s31 = sshrl.u32 %s30, 16
    %s32 = sxor.u32 %s30, %s31
    %v33 = vlaneseq
    %v34 = vshrl.u32 %v33, 7
    %v35 = vlaneseq
    %v36 = vand.u32 %v35, 127
    %v37 = vadd.s32 %v36, 128
    %v38 = vmul.u32 %v34, 256
    %v39 = vadd.s32 %v38, %v36
    %v40 = vadd.s32 %v38, %v37
    %s41 = smul.u32 0, 2048
    %v42 = vstv %s41
    %v43 = vadd.s32 %v42, %v39
    %v44 = vadd.s32 %v42, %v40
    %s45 = sadd.s32 %s32, 1757159915
    %s46 = sshrl.u32 %s45, 16
    %s47 = sxor.u32 %s45, %s46
    %s48 = smul.u32 %s47, 2146121005
    %s49 = sshrl.u32 %s48, 15
    %s50 = sxor.u32 %s48, %s49
    %s51 = smul.u32 %s50, 2221713035
    %s52 = sshrl.u32 %s51, 16
    %s53 = sxor.u32 %s51, %s52
    %v54 = vstv %s32
    %v55 = vxor.u32 %v43, %v54
    %v56 = vxor.u32 %v44, %v54
    %v57 = vshrl.u32 %v55, 16
    %v58 = vshrl.u32 %v56, 16
    %v59 = vxor.u32 %v55, %v57
    %v60 = vxor.u32 %v56, %v58
    %v61 = vmul.u32 %v59, 2146121005
    %v62 = vmul.u32 %v60, 2146121005
    %v63 = vshrl.u32 %v61, 15
    %v64 = vshrl.u32 %v62, 15
    %v65 = vxor.u32 %v61, %v63
    %v66 = vxor.u32 %v62, %v64
    %v67 = vmul.u32 %v65, 2221713035
    %v68 = vmul.u32 %v66, 2221713035
    %v69 = vshrl.u32 %v67, 16
    %v70 = vshrl.u32 %v68, 16
    %v71 = vxor.u32 %v67, %v69
    %v72 = vxor.u32 %v68, %v70
    %v73 = vstv %s53
    %v74 = vxor.u32 %v43, %v73
    %v75 = vxor.u32 %v44, %v73
    %v76 = vshrl.u32 %v74, 16
    %v77 = vshrl.u32 %v75, 16
    %v78 = vxor.u32 %v74, %v76
    %v79 = vxor.u32 %v75, %v77
    %v80 = vmul.u32 %v78, 2146121005
    %v81 = vmul.u32 %v79, 2146121005
    %v82 = vshrl.u32 %v80, 15
    %v83 = vshrl.u32 %v81, 15
    %v84 = vxor.u32 %v80, %v82
    %v85 = vxor.u32 %v81, %v83
    %v86 = vmul.u32 %v84, 2221713035
    %v87 = vmul.u32 %v85, 2221713035
    %v88 = vshrl.u32 %v86, 16
    %v89 = vshrl.u32 %v87, 16
    %v90 = vxor.u32 %v86, %v88
    %v91 = vxor.u32 %v87, %v89
    %v92 = vshrl.u32 %v71, 8
    %v93 = vshrl.u32 %v72, 8
    %v94 = vcvt.s32.f32 %v92
    %v95 = vcvt.s32.f32 %v93
    %v96 = vadd.f32 %v94, 1.0
    %v97 = vadd.f32 %v95, 1.0
    %v98 = vmul.f32 %v96, 5.9604645e-08
    %v99 = vmul.f32 %v97, 5.9604645e-08
    %v100 = vshrl.u32 %v90, 8
    %v101 = vshrl.u32 %v91, 8
    %v102 = vcvt.s32.f32 %v100
    %v103 = vcvt.s32.f32 %v101
    %v104 = vmul.f32 %v102, 5.9604645e-08
    %v105 = vmul.f32 %v103, 5.9604645e-08
    %v106 = vlog2.pop %v98
    %v107 = vmul.f32 %v106, 0.6931472
    %v108 = vlog2.pop %v99
    %v109 = vmul.f32 %v108, 0.6931472
    %v110 = vmul.f32 %v107, -2.0
    %v111 = vmul.f32 %v109, -2.0
    %v112 = vrsqrt.pop %v110
    %v113 = vmul.f32 %v110, %v112
    %vm114 = vcmp.eq.f32.partialorder %v110, inf
    %v115 = vsel %vm114, %v110, %v113
    %vm116 = vcmp.eq.f32.partialorder %v110, 0.0
    %v117 = vand.u32 %v110, 2147483648
    %v118 = vsel %vm116, %v117, %v115
    %v119 = vrsqrt.pop %v111
    %v120 = vmul.f32 %v111, %v119
    %vm121 = vcmp.eq.f32.partialorder %v111, inf
    %v122 = vsel %vm121, %v111, %v120
    %vm123 = vcmp.eq.f32.partialorder %v111, 0.0
    %v124 = vand.u32 %v111, 2147483648
    %v125 = vsel %vm123, %v124, %v122
    %v126 = vmul.f32 %v104, 6.2831855
    %v127 = vmul.f32 %v105, 6.2831855
    %v128 = vand.u32 2147483647, %v126
    %vm129 = vcmp.le.f32.partialorder %v128, 0.7853982
    %vm130 = vcmp.lt.s32.totalorder %v126, 0
    %v131 = vand.u32 %v126, 2139095040
    %v132 = vshrl.u32 %v131, 23
    %v133 = vsub.s32 %v132, 127
    %v134 = vand.u32 2147483647, %v126
    %v135 = vand.u32 %v134, 8388607
    %v136 = vor.u32 %v135, 8388608
    %v137 = vsub.s32 0, %v136
    %v138 = vadd.s32 %v133, 1
    %vm139 = vcmp.gt.s32.totalorder %v138, 0
    %v140 = vsel %vm139, %v138, 0
    %v141 = vshrl.u32 %v140, 5
    %v142 = vand.u32 %v140, 31
    %v143 = vsub.s32 32, %v142
    %v144 = vshrl.u32 683565275, %v143
    %v145 = vshll.u32 683565275, %v142
    %v146 = vshrl.u32 2475754826, %v143
    %v147 = vor.u32 %v145, %v146
    %v148 = vshll.u32 2475754826, %v142
    %v149 = vshrl.u32 2131351028, %v143
    %v150 = vor.u32 %v148, %v149
    %v151 = vshll.u32 2131351028, %v142
    %v152 = vshrl.u32 2102212464, %v143
    %v153 = vor.u32 %v151, %v152
    %v154 = vshll.u32 2102212464, %v142
    %v155 = vshrl.u32 920167782, %v143
    %v156 = vor.u32 %v154, %v155
    %v157 = vshll.u32 920167782, %v142
    %v158 = vshrl.u32 1326507024, %v143
    %v159 = vor.u32 %v157, %v158
    %vm160 = vcmp.lt.s32.totalorder %v141, 1
    %vm161 = vcmp.lt.s32.totalorder %v141, 2
    %vm162 = vcmp.lt.s32.totalorder %v141, 3
    %vm163 = vcmp.lt.s32.totalorder %v141, 4
    %v164 = vsel %vm160, %v144, %v147
    %v165 = vsel %vm163, %v153, 2102212464
    %v166 = vsel %vm162, %v150, %v165
    %v167 = vsel %vm161, %v164, %v166
    %v168 = vsel %vm160, %v147, %v150
    %v169 = vsel %vm163, %v156, 920167782
    %v170 = vsel %vm162, %v153, %v169
    %v171 = vsel %vm161, %v168, %v170
    %v172 = vsel %vm160, %v150, %v153
    %v173 = vsel %vm163, %v159, 1326507024
    %v174 = vsel %vm162, %v156, %v173
    %v175 = vsel %vm161, %v172, %v174
    %v176 = vshll.u32 %v136, 8
    %v177 = vmul.u32.u64.compose %v176, %v175
    %v178 = vextract.low.u32 %v177
    %v179 = vextract.high.u32 %v177
    %v180 = vmul.u32.u64.compose %v176, %v171
    %v181 = vextract.low.u32 %v180
    %v182 = vextract.high.u32 %v180
    %v183 = vmul.u32 %v176, %v167
    %v184 = vadd.s32 %v179, %v181
    %vm185 = vc.u32 %v179, %v181
    %v186 = vadd.s32 %v182, 1
    %v187 = vsel %vm185, %v186, %v182
    %v188 = vadd.s32 %v183, %v187
    %v189 = vadd.s32 %v188, 536870912
    %v190 = vshrl.u32 %v189, 30
    %v191 = vshll.u32 %v190, 30
    %v192 = vsub.s32 %v188, %v191
    %vm193 = vcmp.lt.s32.totalorder %v192, 0
    %v194 = vsub.s32 0, %v192
    %v195 = vsel %vm193, %v194, %v192
    %v196 = vclz %v195
    %v197 = vsub.s32 %v196, 2
    %vm198 = vcmp.gt.s32.totalorder 0, %v197
    %v199 = vsel %vm198, 0, %v197
    %v200 = vsub.s32 32, %v199
    %v201 = vshll.u32 %v192, %v199
    %v202 = vshrl.u32 %v184, %v200
    %v203 = vor.u32 %v201, %v202
    %v204 = vsub.s32 4294967266, %v199
    %v205 = vadd.s32 %v204, 127
    %v206 = vshll.u32 %v205, 23
    %v207 = vor.u32 4788187, %v206
    %v208 = vand.u32 2147483647, %v207
    %v210 = vcvt.s32.f32 %v203
    %v211 = vmul.f32 %v210, %v208
    %v212 = vxor.u32 %v211, 2147483648
    %v213 = vsel %vm130, %v212, %v211
    %v214 = vsub.s32 4, %v190
    %v215 = vsel %vm130, %v214, %v190
    %v216 = vsel %vm129, %v126, %v213
    %v217 = vsel %vm129, 0, %v215
    %v218 = vcosq.f32.pop %v216
    %v219 = vsinq.f32.pop %v216
    %vm220 = vweird.f32 %v126
    %v221 = vand.u32 %v217, 3
    %vm222 = vcmp.lt.s32.totalorder %v221, 2
    %vm223 = vcmp.eq.s32.totalorder %v221, 0
    %v224 = vxor.u32 %v219, 2147483648
    %v225 = vsel %vm223, %v218, %v224
    %vm226 = vcmp.eq.s32.totalorder %v221, 2
    %v227 = vxor.u32 %v218, 2147483648
    %v228 = vsel %vm226, %v227, %v219
    %v229 = vsel %vm222, %v225, %v228
    %v230 = vsel %vm220, nan, %v229
    %v231 = vand.u32 2147483647, %v127
    %vm232 = vcmp.le.f32.partialorder %v231, 0.7853982
    %vm233 = vcmp.lt.s32.totalorder %v127, 0
    %v234 = vand.u32 %v127, 2139095040
    %v235 = vshrl.u32 %v234, 23
    %v236 = vsub.s32 %v235, 127
    %v237 = vand.u32 2147483647, %v127
    %v238 = vand.u32 %v237, 8388607
    %v239 = vor.u32 %v238, 8388608
    %v240 = vsub.s32 0, %v239
    %v241 = vadd.s32 %v236, 1
    %vm242 = vcmp.gt.s32.totalorder %v241, 0
    %v243 = vsel %vm242, %v241, 0
    %v244 = vshrl.u32 %v243, 5
    %v245 = vand.u32 %v243, 31
    %v246 = vsub.s32 32, %v245
    %v247 = vshrl.u32 683565275, %v246
    %v248 = vshll.u32 683565275, %v245
    %v249 = vshrl.u32 2475754826, %v246
    %v250 = vor.u32 %v248, %v249
    %v251 = vshll.u32 2475754826, %v245
    %v252 = vshrl.u32 2131351028, %v246
    %v253 = vor.u32 %v251, %v252
    %v254 = vshll.u32 2131351028, %v245
    %v255 = vshrl.u32 2102212464, %v246
    %v256 = vor.u32 %v254, %v255
    %v257 = vshll.u32 2102212464, %v245
    %v258 = vshrl.u32 920167782, %v246
    %v259 = vor.u32 %v257, %v258
    %v260 = vshll.u32 920167782, %v245
    %v261 = vshrl.u32 1326507024, %v246
    %v262 = vor.u32 %v260, %v261
    %vm263 = vcmp.lt.s32.totalorder %v244, 1
    %vm264 = vcmp.lt.s32.totalorder %v244, 2
    %vm265 = vcmp.lt.s32.totalorder %v244, 3
    %vm266 = vcmp.lt.s32.totalorder %v244, 4
    %v267 = vsel %vm263, %v247, %v250
    %v268 = vsel %vm266, %v256, 2102212464
    %v269 = vsel %vm265, %v253, %v268
    %v270 = vsel %vm264, %v267, %v269
    %v271 = vsel %vm263, %v250, %v253
    %v272 = vsel %vm266, %v259, 920167782
    %v273 = vsel %vm265, %v256, %v272
    %v274 = vsel %vm264, %v271, %v273
    %v275 = vsel %vm263, %v253, %v256
    %v276 = vsel %vm266, %v262, 1326507024
    %v277 = vsel %vm265, %v259, %v276
    %v278 = vsel %vm264, %v275, %v277
    %v279 = vshll.u32 %v239, 8
    %v280 = vmul.u32.u64.compose %v279, %v278
    %v281 = vextract.low.u32 %v280
    %v282 = vextract.high.u32 %v280
    %v283 = vmul.u32.u64.compose %v279, %v274
    %v284 = vextract.low.u32 %v283
    %v285 = vextract.high.u32 %v283
    %v286 = vmul.u32 %v279, %v270
    %v287 = vadd.s32 %v282, %v284
    %vm288 = vc.u32 %v282, %v284
    %v289 = vadd.s32 %v285, 1
    %v290 = vsel %vm288, %v289, %v285
    %v291 = vadd.s32 %v286, %v290
    %v292 = vadd.s32 %v291, 536870912
    %v293 = vshrl.u32 %v292, 30
    %v294 = vshll.u32 %v293, 30
    %v295 = vsub.s32 %v291, %v294
    %vm296 = vcmp.lt.s32.totalorder %v295, 0
    %v297 = vsub.s32 0, %v295
    %v298 = vsel %vm296, %v297, %v295
    %v299 = vclz %v298
    %v300 = vsub.s32 %v299, 2
    %vm301 = vcmp.gt.s32.totalorder 0, %v300
    %v302 = vsel %vm301, 0, %v300
    %v303 = vsub.s32 32, %v302
    %v304 = vshll.u32 %v295, %v302
    %v305 = vshrl.u32 %v287, %v303
    %v306 = vor.u32 %v304, %v305
    %v307 = vsub.s32 4294967266, %v302
    %v308 = vadd.s32 %v307, 127
    %v309 = vshll.u32 %v308, 23
    %v310 = vor.u32 4788187, %v309
    %v311 = vand.u32 2147483647, %v310
    %v313 = vcvt.s32.f32 %v306
    %v314 = vmul.f32 %v313, %v311
    %v315 = vxor.u32 %v314, 2147483648
    %v316 = vsel %vm233, %v315, %v314
    %v317 = vsub.s32 4, %v293
    %v318 = vsel %vm233, %v317, %v293
    %v319 = vsel %vm232, %v127, %v316
    %v320 = vsel %vm232, 0, %v318
    %v321 = vcosq.f32.pop %v319
    %v322 = vsinq.f32.pop %v319
    %vm323 = vweird.f32 %v127
    %v324 = vand.u32 %v320, 3
    %vm325 = vcmp.lt.s32.totalorder %v324, 2
    %vm326 = vcmp.eq.s32.totalorder %v324, 0
    %v327 = vxor.u32 %v322, 2147483648
    %v328 = vsel %vm326, %v321, %v327
    %vm329 = vcmp.eq.s32.totalorder %v324, 2
    %v330 = vxor.u32 %v321, 2147483648
    %v331 = vsel %vm329, %v330, %v322
    %v332 = vsel %vm325, %v328, %v331
    %v333 = vsel %vm323, nan, %v332
    %v334 = vmul.f32 %v118, %v230
    %v335 = vmul.f32 %v125, %v333
    %v336 = vmul.f32 %v334, 0.003921569
    %v337 = vmul.f32 %v335, 0.003921569
    %v338 = vadd.f32 %v336, 0.0
    %v339 = vadd.f32 %v337, 0.0
    %v340 = vld [vmem:[#allocation4] sm:$0xff]
    %v341 = vld [vmem:[#allocation4 + $0x8] sm:$0xff]
    %v342 = vadd.f32 %v340, %v338
    %v343 = vadd.f32 %v341, %v339
    %344 = vst [vmem:[#allocation7] sm:$0xff] %v342
    %345 = vst [vmem:[#allocation7 + $0x8] sm:$0xff] %v343
    // Predicated region
    $region10: #{tpu_custom_call.1} parent=1 // pred_check
      _
    $region11: #{tpu_custom_call.1} parent=1 // pred_check_branch
      %347 = sbr.rel (0) target = $region13
    $region12: #{tpu_custom_call.1} parent=1 // pred_region
      %s349 = ssub.s32 256, 256
      %350 = vsyncadd [#allocation6], %s349
      %s352 = sshll.u32 [#allocation7], 4
      %s353 = int_to_ptr.vmem [resolvable:$true] %s352
      %355 = dma.vmem_to_hbm [thread:$0]  %s353, 256, %s2, [#allocation6]
    $region13: #{tpu_custom_call.1} parent=1 // pred_fallthru
      _
    // Predicated region
    $region14: #{tpu_custom_call.1} parent=1 // pred_check
      _
    $region15: #{tpu_custom_call.1} parent=1 // pred_check_branch
      %357 = sbr.rel (0) target = $region17
    $region16: #{tpu_custom_call.1} parent=1 // pred_region
      %358 = dma.done [#allocation6], 256
    $region17: #{tpu_custom_call.1} parent=1 // pred_fallthru
      _
    %359 = vsyncpa [#allocation5], 1
    %360 = vsyncpa [#allocation6], 1

</llo_original>
